<compile_context>
chip_gen: v5e
topology: v5e:2x2
jax: 0.10.0
libtpu: 0.0.40
codegen_flags: <defaults>
</compile_context>

<pallas_src>
import functools

import jax
import jax.numpy as jnp
from jax.experimental import pallas as pl
from jax.experimental.pallas import tpu as pltpu

_INV_SQRT2 = 0.7071067811865476  # 1/sqrt(2), hoisted constant


def _gelu_exact(x):
    # nn.GELU() default = exact erf formulation
    return 0.5 * x * (1.0 + jax.lax.erf(x * _INV_SQRT2))


def _round_up(n, m):
    return (n + m - 1) // m * m


def _cdiv(a, b):
    return (a + b - 1) // b


def _buf_bytes(rows, cols, itemsize, nbuf):
    # VMEM footprint of one pipelined buffer, with (8,128) layout padding.
    return _round_up(rows, 8) * _round_up(cols, 128) * itemsize * nbuf


# ---------------------------------------------------------------------------
# Kernel
# ---------------------------------------------------------------------------
def mlp_skip_kernel(x_ref, w1_ref, b1_ref, w2_ref, b2_ref, o_ref):
    x = x_ref[...]                                            # (tb, IN) f32

    # Linear1 + folded BN1 (scale folded into W1/b1). bf16 MXU operands, f32 acc.
    h = jnp.dot(x.astype(w1_ref.dtype), w1_ref[...],
                preferred_element_type=jnp.float32) + b1_ref[...]
    h = _gelu_exact(h)                                        # Dropout(eval) = id

    # Linear2 + folded BN2
    y = jnp.dot(h.astype(w2_ref.dtype), w2_ref[...],
                preferred_element_type=jnp.float32) + b2_ref[...]
    y = _gelu_exact(y)                                        # Dropout(eval) = id

    # skip connection: residual uses the exact f32 x. The final partial batch
    # block (if any) carries garbage rows through the matmuls; Pallas masks
    # them on the output store, so only valid rows reach HBM.
    o_ref[...] = (0.8 * x + 0.2 * y).astype(o_ref.dtype)


# ---------------------------------------------------------------------------
# One-time parameter preparation (hoisted out of the per-call path)
# ---------------------------------------------------------------------------
def prepare_params(w1, b1, s1, t1, w2, b2, s2, t2, mxu_dtype=jnp.bfloat16):
    """Fold eval-mode BN into the Linears, cast weights to the MXU dtype and
    lane-pad only the hidden dimension. Call ONCE and reuse the result."""
    IN, HID = w1.shape
    HID2, OUT = w2.shape
    assert HID2 == HID

    # exact BN fold: (xW + b)*s + t == x(W*s) + (b*s + t)
    w1f = (w1 * s1[None, :]).astype(mxu_dtype)
    b1f = (b1 * s1 + t1).astype(jnp.float32)
    w2f = (w2 * s2[None, :]).astype(mxu_dtype)
    b2f = (b2 * s2 + t2).astype(jnp.float32)

    # Lane-pad the hidden dim only (weight-side, one-time cost). Zero padding
    # keeps results exact: padded h cols = gelu(0) = 0, times zero W2 rows = 0.
    HIDp = _round_up(HID, 128)
    if HIDp != HID:
        w1f = jnp.pad(w1f, ((0, 0), (0, HIDp - HID)))
        b1f = jnp.pad(b1f, (0, HIDp - HID))
        w2f = jnp.pad(w2f, ((0, HIDp - HID), (0, 0)))

    return w1f, b1f.reshape(1, HIDp), w2f, b2f.reshape(1, OUT)


# ---------------------------------------------------------------------------
# Per-call wrapper
# ---------------------------------------------------------------------------
@functools.partial(jax.jit, static_argnames=("tile_b",))
def mlp_skip(x, w1p, b1p, w2p, b2p, *, tile_b=512):
    N, IN = x.shape
    INw, HIDp = w1p.shape
    HIDp2, OUT = w2p.shape
    assert INw == IN and HIDp2 == HIDp
    assert OUT == IN, "skip connection requires out_features == in_features"

    # Batch tile: multiple of 16 sublanes (bf16 packing), clamped for small N,
    # and split so the 'parallel' batch axis has >= 2 steps (v7x has 2 TCs).
    tb = _round_up(min(tile_b, _round_up(N, 16)), 16)
    if _cdiv(N, tb) < 2 and tb > 8:
        tb = max(8, _round_up((tb + 1) // 2, 8))
    grid = (_cdiv(N, tb),)

    full = lambda i: (0, 0)
    single = pl.Buffered(1)          # constant index_map -> no double-buffering

    # Explicit VMEM budget: double-buffered activations, single-buffered
    # weights, plus headroom for the f32 h/y intermediates. Capped below v7x's
    # 64 MiB physical VMEM.
    w_itemsize = jnp.dtype(w1p.dtype).itemsize
    vmem_need = (
        _buf_bytes(tb, IN, 4, 2)             # x (f32, double-buffered)
        + _buf_bytes(tb, OUT, 4, 2)          # out (f32, double-buffered)
        + _buf_bytes(IN, HIDp, w_itemsize, 1)    # W1 (single-buffered)
        + _buf_bytes(HIDp, OUT, w_itemsize, 1)   # W2 (single-buffered)
        + _buf_bytes(1, HIDp, 4, 1)          # b1
        + _buf_bytes(1, OUT, 4, 1)           # b2
        + _buf_bytes(tb, HIDp, 4, 2)         # h intermediate + temporaries
        + _buf_bytes(tb, max(HIDp, OUT), 4, 2)
    )
    vmem_limit = int(min(max(2 * vmem_need, 8 << 20), 64 << 20))

    cost = pl.CostEstimate(
        flops=2 * N * IN * HIDp + 2 * N * HIDp * OUT,
        transcendentals=N * (HIDp + OUT),
        bytes_accessed=(N * IN + N * OUT) * 4
        + (w1p.size + w2p.size) * w_itemsize
        + (b1p.size + b2p.size) * 4,
    )

    return pl.pallas_call(
        mlp_skip_kernel,
        out_shape=jax.ShapeDtypeStruct((N, OUT), x.dtype),
        grid_spec=pltpu.PrefetchScalarGridSpec(
            num_scalar_prefetch=0,
            grid=grid,
            in_specs=[
                pl.BlockSpec((tb, IN), lambda i: (i, 0)),                 # x (f32)
                pl.BlockSpec((IN, HIDp), full, pipeline_mode=single),     # W1 bf16
                pl.BlockSpec((1, HIDp), full, pipeline_mode=single),      # b1 f32
                pl.BlockSpec((HIDp, OUT), full, pipeline_mode=single),    # W2 bf16
                pl.BlockSpec((1, OUT), full, pipeline_mode=single),       # b2 f32
            ],
            out_specs=pl.BlockSpec((tb, OUT), lambda i: (i, 0)),
        ),
        compiler_params=pltpu.CompilerParams(
            dimension_semantics=("parallel",),
            vmem_limit_bytes=vmem_limit,
        ),
        cost_estimate=cost,
    )(x, w1p, b1p, w2p, b2p)


# ---------------------------------------------------------------------------
# Demo / self-check
# ---------------------------------------------------------------------------
def make_params(key, in_features, hidden_features, out_features, eps=1e-5):
    ks = jax.random.split(key, 8)
    # Linear weights stored as (in, out) so kernel computes x @ W + b
    w1 = jax.random.normal(ks[0], (in_features, hidden_features), jnp.float32) * 0.05
    b1 = jax.random.normal(ks[1], (hidden_features,), jnp.float32) * 0.05
    w2 = jax.random.normal(ks[2], (hidden_features, out_features), jnp.float32) * 0.05
    b2 = jax.random.normal(ks[3], (out_features,), jnp.float32) * 0.05

    # BatchNorm1d params + running stats (deterministic, non-trivial)
    g1 = 1.0 + 0.1 * jax.random.normal(ks[4], (hidden_features,), jnp.float32)
    be1 = 0.1 * jax.random.normal(ks[5], (hidden_features,), jnp.float32)
    rm1 = jnp.zeros((hidden_features,), jnp.float32)
    rv1 = jnp.ones((hidden_features,), jnp.float32)

    g2 = 1.0 + 0.1 * jax.random.normal(ks[6], (out_features,), jnp.float32)
    be2 = 0.1 * jax.random.normal(ks[7], (out_features,), jnp.float32)
    rm2 = jnp.zeros((out_features,), jnp.float32)
    rv2 = jnp.ones((out_features,), jnp.float32)

    # eval-mode BN as per-feature affine: y = x*scale + shift
    s1 = g1 / jnp.sqrt(rv1 + eps)
    t1 = be1 - rm1 * s1
    s2 = g2 / jnp.sqrt(rv2 + eps)
    t2 = be2 - rm2 * s2
    return w1, b1, s1, t1, w2, b2, s2, t2


if __name__ == "__main__":
    key = jax.random.PRNGKey(0)
    kx, kp = jax.random.split(key)

    batch, in_features, hidden_features = 16, 32, 64
    out_features = in_features  # required by the 0.8*x + 0.2*classifier(x) skip

    x = jax.random.normal(kx, (batch, in_features), jnp.float32)
    raw = make_params(kp, in_features, hidden_features, out_features)

    # one-time prep (BN fold, bf16 cast, hidden-dim pad) -- reused across calls
    prepped = prepare_params(*raw)
    prepped = jax.tree_util.tree_map(jax.block_until_ready, prepped)

    out = mlp_skip(x, *prepped)
    jax.block_until_ready(out)

    # sanity check against a pure-JAX f32 reference (bf16 MXU operands ->
    # loosened tolerance)
    w1, b1, s1, t1, w2, b2, s2, t2 = raw
    h = _gelu_exact((x @ w1 + b1) * s1 + t1)
    y = _gelu_exact((h @ w2 + b2) * s2 + t2)
    ref = 0.8 * x + 0.2 * y
    assert out.shape == ref.shape
    assert jnp.allclose(out, ref, atol=1e-2, rtol=1e-2), (
        float(jnp.max(jnp.abs(out - ref))))

    print("KERNEL_OK")
</pallas_src>

<mosaic_0001>
module attributes {stable_mosaic.version = 11 : i64} {
  func.func @mlp_skip_kernel(%arg0: i32, %arg1: memref<8x32xf32, #tpu.memory_space<vmem>>, %arg2: memref<32x128xbf16, #tpu.memory_space<vmem>>, %arg3: memref<1x128xf32, #tpu.memory_space<vmem>>, %arg4: memref<128x32xbf16, #tpu.memory_space<vmem>>, %arg5: memref<1x32xf32, #tpu.memory_space<vmem>>, %arg6: memref<8x32xf32, #tpu.memory_space<vmem>>) attributes {dimension_semantics = [#tpu.dimension_semantics<parallel>], iteration_bounds = array<i64: 2>, scalar_prefetch = 0 : i64, scratch_operands = 0 : i64, tpu.core_type = #tpu.core_type<tc>, window_params = [{transform_indices = @transform_0, window_bounds = array<i64: 8, 32>}, {pipeline_mode = #tpu.pipeline_mode<synchronous>, transform_indices = @transform_1, window_bounds = array<i64: 32, 128>}, {pipeline_mode = #tpu.pipeline_mode<synchronous>, transform_indices = @transform_2, window_bounds = array<i64: 1, 128>}, {pipeline_mode = #tpu.pipeline_mode<synchronous>, transform_indices = @transform_3, window_bounds = array<i64: 128, 32>}, {pipeline_mode = #tpu.pipeline_mode<synchronous>, transform_indices = @transform_4, window_bounds = array<i64: 1, 32>}, {transform_indices = @transform_5, window_bounds = array<i64: 8, 32>}]} {
    %c0 = arith.constant 0 : index
    %c0_0 = arith.constant 0 : index
    %0 = vector.load %arg1[%c0, %c0_0] : memref<8x32xf32, #tpu.memory_space<vmem>>, vector<8x32xf32>
    %1 = arith.truncf %0 : vector<8x32xf32> to vector<8x32xbf16>
    %c0_1 = arith.constant 0 : index
    %c0_2 = arith.constant 0 : index
    %2 = vector.load %arg2[%c0_1, %c0_2] : memref<32x128xbf16, #tpu.memory_space<vmem>>, vector<32x128xbf16>
    %cst = arith.constant dense<0.000000e+00> : vector<8x128xf32>
    %3 = tpu.matmul %1, %2, %cst {dimension_numbers = #tpu.dot_dimension_numbers<[1], [0], [0], [1], [0, 0, 1, 1], [], []>} : vector<8x32xbf16>, vector<32x128xbf16>, vector<8x128xf32> -> vector<8x128xf32>
    %c0_3 = arith.constant 0 : index
    %c0_4 = arith.constant 0 : index
    %4 = vector.load %arg3[%c0_3, %c0_4] : memref<1x128xf32, #tpu.memory_space<vmem>>, vector<1x128xf32>
    %5 = vector.broadcast %4 : vector<1x128xf32> to vector<8x128xf32>
    %6 = arith.addf %3, %5 : vector<8x128xf32>
    %cst_5 = arith.constant 5.000000e-01 : f32
    %7 = vector.broadcast %cst_5 : f32 to vector<8x128xf32>
    %8 = arith.mulf %7, %6 : vector<8x128xf32>
    %cst_6 = arith.constant 0.707106769 : f32
    %9 = vector.broadcast %cst_6 : f32 to vector<8x128xf32>
    %10 = arith.mulf %6, %9 : vector<8x128xf32>
    %11 = math.erf %10 : vector<8x128xf32>
    %cst_7 = arith.constant 1.000000e+00 : f32
    %12 = vector.broadcast %cst_7 : f32 to vector<8x128xf32>
    %13 = arith.addf %12, %11 : vector<8x128xf32>
    %14 = arith.mulf %8, %13 : vector<8x128xf32>
    %15 = arith.truncf %14 : vector<8x128xf32> to vector<8x128xbf16>
    %c0_8 = arith.constant 0 : index
    %c0_9 = arith.constant 0 : index
    %16 = vector.load %arg4[%c0_8, %c0_9] : memref<128x32xbf16, #tpu.memory_space<vmem>>, vector<128x32xbf16>
    %cst_10 = arith.constant dense<0.000000e+00> : vector<8x32xf32>
    %17 = tpu.matmul %15, %16, %cst_10 {dimension_numbers = #tpu.dot_dimension_numbers<[1], [0], [0], [1], [0, 0, 1, 1], [], []>} : vector<8x128xbf16>, vector<128x32xbf16>, vector<8x32xf32> -> vector<8x32xf32>
    %c0_11 = arith.constant 0 : index
    %c0_12 = arith.constant 0 : index
    %18 = vector.load %arg5[%c0_11, %c0_12] : memref<1x32xf32, #tpu.memory_space<vmem>>, vector<1x32xf32>
    %19 = vector.broadcast %18 : vector<1x32xf32> to vector<8x32xf32>
    %20 = arith.addf %17, %19 : vector<8x32xf32>
    %cst_13 = arith.constant 5.000000e-01 : f32
    %21 = vector.broadcast %cst_13 : f32 to vector<8x32xf32>
    %22 = arith.mulf %21, %20 : vector<8x32xf32>
    %cst_14 = arith.constant 0.707106769 : f32
    %23 = vector.broadcast %cst_14 : f32 to vector<8x32xf32>
    %24 = arith.mulf %20, %23 : vector<8x32xf32>
    %25 = math.erf %24 : vector<8x32xf32>
    %cst_15 = arith.constant 1.000000e+00 : f32
    %26 = vector.broadcast %cst_15 : f32 to vector<8x32xf32>
    %27 = arith.addf %26, %25 : vector<8x32xf32>
    %28 = arith.mulf %22, %27 : vector<8x32xf32>
    %cst_16 = arith.constant 8.000000e-01 : f32
    %29 = vector.broadcast %cst_16 : f32 to vector<8x32xf32>
    %30 = arith.mulf %29, %0 : vector<8x32xf32>
    %cst_17 = arith.constant 2.000000e-01 : f32
    %31 = vector.broadcast %cst_17 : f32 to vector<8x32xf32>
    %32 = arith.mulf %31, %28 : vector<8x32xf32>
    %33 = arith.addf %30, %32 : vector<8x32xf32>
    %c0_18 = arith.constant 0 : index
    %c0_19 = arith.constant 0 : index
    %34 = vector.load %arg6[%c0_18, %c0_19] : memref<8x32xf32, #tpu.memory_space<vmem>>, vector<8x32xf32>
    tpu.vector_store %arg6[%c0_18, %c0_19], %33 {strides = array<i32>} : memref<8x32xf32, #tpu.memory_space<vmem>>, vector<8x32xf32>,
    return
  }
  func.func @transform_0(%arg0: i32) -> (i32, i32) {
    %c0_i32 = arith.constant 0 : i32
    %c0_i32_0 = arith.constant 0 : i32
    return %arg0, %c0_i32 : i32, i32
  }
  func.func @transform_1(%arg0: i32) -> (i32, i32) {
    %c0_i32 = arith.constant 0 : i32
    %c0_i32_0 = arith.constant 0 : i32
    %c0_i32_1 = arith.constant 0 : i32
    return %c0_i32, %c0_i32_0 : i32, i32
  }
  func.func @transform_2(%arg0: i32) -> (i32, i32) {
    %c0_i32 = arith.constant 0 : i32
    %c0_i32_0 = arith.constant 0 : i32
    %c0_i32_1 = arith.constant 0 : i32
    return %c0_i32, %c0_i32_0 : i32, i32
  }
  func.func @transform_3(%arg0: i32) -> (i32, i32) {
    %c0_i32 = arith.constant 0 : i32
    %c0_i32_0 = arith.constant 0 : i32
    %c0_i32_1 = arith.constant 0 : i32
    return %c0_i32, %c0_i32_0 : i32, i32
  }
  func.func @transform_4(%arg0: i32) -> (i32, i32) {
    %c0_i32 = arith.constant 0 : i32
    %c0_i32_0 = arith.constant 0 : i32
    %c0_i32_1 = arith.constant 0 : i32
    return %c0_i32, %c0_i32_0 : i32, i32
  }
  func.func @transform_5(%arg0: i32) -> (i32, i32) {
    %c0_i32 = arith.constant 0 : i32
    %c0_i32_0 = arith.constant 0 : i32
    return %arg0, %c0_i32 : i32, i32
  }
}

</mosaic_0001>

<llo_original>
// kernel: mlp_skip.1
$region0: #{mlp_skip.1}
  #allocation0 [shape = 'u32[]', space=smem, size = 0x4, offset = 0x4, fixed_abs, tag = 'smem constant byte address 0x4 - core index']
  #allocation1 [shape = 'u32[72,128]{1,0:T(1,128)}', space=vmem, size = 0x9000, scoped, tag = 'internal scratch']
  %s0 = inlined_call_operand.vmem [shape: f32[16,32], index: 0, kind: input, shape index: {}]
  %s1 = inlined_call_operand.vmem [shape: bf16[32,128], index: 1, kind: input, shape index: {}]
  %s2 = inlined_call_operand.vmem [shape: f32[1,128], index: 2, kind: input, shape index: {}]
  %s3 = inlined_call_operand.vmem [shape: bf16[128,32], index: 3, kind: input, shape index: {}]
  %s4 = inlined_call_operand.vmem [shape: f32[1,32], index: 4, kind: input, shape index: {}]
  %s5 = inlined_call_operand.hbm [shape: f32[16,32], index: 5, kind: output, shape index: {}]
  %s6 = sld [smem:[#allocation0]]
  $region53: #{mlp_skip.1} parent=0
    _
  %s8 = ssub.s32 1, %s6
  %s9 = scalar_select 0, %s8, %s6
  $region1: #{mlp_skip.1} parent=0
    #allocation2 [shape = 'u8[8192]{0}', space=vmem, size = 0x2000, scoped, tag = 'output window, operand 0']
    #allocation3 [shape = 's32[2]{0}', space=sflag, size = 0x8, scoped, tag = 'scoped memory for mlp_skip.1']
    %10 = vsyncpa [#allocation3], 0
    %s11 = scalar_lea.sflag [#allocation3], 1
    %12 = vsyncpa %s11, 0
    loop: start=0, step=1, limit=4
    $region2: #{mlp_skip.1} parent=1 // loop_pre_header
      _
    $region3: #{mlp_skip.1} parent=1 // loop_header
      %s14 = sphi 0, %s18
      %p15 = scmp.ge.s32.totalorder %s14, 4
      %s24 = sphi 0, %s26
      %s27 = sphi 0, %s24
      %s28 = sphi 0, %s27
      %s44 = sphi 0, %s28
      %s48 = sphi 0, %s48
      %s50 = sphi 0, %s48
      %s51 = sphi 0, %s50
      %s65 = sphi 0, %s51
      %s69 = sphi 0, %s69
      %s71 = sphi 0, %s69
      %s72 = sphi 0, %s71
      %s86 = sphi 0, %s72
      %s90 = sphi 0, %s90
      %s92 = sphi 0, %s90
      %s93 = sphi 0, %s92
      %s107 = sphi 0, %s93
      %s111 = sphi 0, %s111
      %s113 = sphi 0, %s111
      %s114 = sphi 0, %s113
      %s128 = sphi 0, %s114
      %s134 = sphi 0, %s136
      %s137 = sphi 0, %s134
      %s138 = sphi 0, %s137
      %s154 = sphi 0, %s138
    $region4: #{mlp_skip.1} parent=1 // loop_header_branch
      %17 = sbr.rel (%p15) target = $region8
    $region5: #{mlp_skip.1} parent=1 // loop_body
      %s19 = ssub.s32 %s14, 1
      %s20 = ssub.s32 %s14, 2
      %s21 = sadd.s32 %s14, 1
      %s22 = ssub.s32 %s14, %s21
      %p23 = scmp.eq.s32.totalorder %s22, 0
      %s25 = sadd.s32 %s24, 1
      %s26 = scalar_select %p23, %s24, %s25
      %p29 = pneg %p23
      %p30 = scmp.eq.s32.totalorder %s14, 1
      %p31 = por %p29, %p30
      %p32 = scmp.ne.s32.totalorder %s24, %s27
      %p33 = scmp.eq.s32.totalorder %s14, 0
      %p34 = por %p32, %p33
      %p35 = scmp.ne.s32.totalorder %s24, %s27
      %p36 = scmp.eq.s32.totalorder %s19, 1
      %p37 = por %p35, %p36
      %p38 = scmp.ne.s32.totalorder %s27, %s28
      %p39 = scmp.eq.s32.totalorder %s19, 0
      %p40 = por %p38, %p39
      %p41 = scmp.ne.s32.totalorder %s27, %s28
      %p42 = scmp.eq.s32.totalorder %s20, 1
      %p43 = por %p41, %p42
      %p45 = scmp.ne.s32.totalorder %s28, %s44
      %p46 = scmp.eq.s32.totalorder %s20, 0
      %p47 = por %p45, %p46
      %s49 = sadd.s32 %s48, 1
      %p52 = scmp.eq.s32.totalorder %s14, 1
      %p53 = scmp.ne.s32.totalorder %s48, %s50
      %p54 = scmp.eq.s32.totalorder %s14, 0
      %p55 = por %p53, %p54
      %p56 = scmp.ne.s32.totalorder %s48, %s50
      %p57 = scmp.eq.s32.totalorder %s19, 1
      %p58 = por %p56, %p57
      %p59 = scmp.ne.s32.totalorder %s50, %s51
      %p60 = scmp.eq.s32.totalorder %s19, 0
      %p61 = por %p59, %p60
      %p62 = scmp.ne.s32.totalorder %s50, %s51
      %p63 = scmp.eq.s32.totalorder %s20, 1
      %p64 = por %p62, %p63
      %p66 = scmp.ne.s32.totalorder %s51, %s65
      %p67 = scmp.eq.s32.totalorder %s20, 0
      %p68 = por %p66, %p67
      %s70 = sadd.s32 %s69, 1
      %p73 = scmp.eq.s32.totalorder %s14, 1
      %p74 = scmp.ne.s32.totalorder %s69, %s71
      %p75 = scmp.eq.s32.totalorder %s14, 0
      %p76 = por %p74, %p75
      %p77 = scmp.ne.s32.totalorder %s69, %s71
      %p78 = scmp.eq.s32.totalorder %s19, 1
      %p79 = por %p77, %p78
      %p80 = scmp.ne.s32.totalorder %s71, %s72
      %p81 = scmp.eq.s32.totalorder %s19, 0
      %p82 = por %p80, %p81
      %p83 = scmp.ne.s32.totalorder %s71, %s72
      %p84 = scmp.eq.s32.totalorder %s20, 1
      %p85 = por %p83, %p84
      %p87 = scmp.ne.s32.totalorder %s72, %s86
      %p88 = scmp.eq.s32.totalorder %s20, 0
      %p89 = por %p87, %p88
      %s91 = sadd.s32 %s90, 1
      %p94 = scmp.eq.s32.totalorder %s14, 1
      %p95 = scmp.ne.s32.totalorder %s90, %s92
      %p96 = scmp.eq.s32.totalorder %s14, 0
      %p97 = por %p95, %p96
      %p98 = scmp.ne.s32.totalorder %s90, %s92
      %p99 = scmp.eq.s32.totalorder %s19, 1
      %p100 = por %p98, %p99
      %p101 = scmp.ne.s32.totalorder %s92, %s93
      %p102 = scmp.eq.s32.totalorder %s19, 0
      %p103 = por %p101, %p102
      %p104 = scmp.ne.s32.totalorder %s92, %s93
      %p105 = scmp.eq.s32.totalorder %s20, 1
      %p106 = por %p104, %p105
      %p108 = scmp.ne.s32.totalorder %s93, %s107
      %p109 = scmp.eq.s32.totalorder %s20, 0
      %p110 = por %p108, %p109
      %s112 = sadd.s32 %s111, 1
      %p115 = scmp.eq.s32.totalorder %s14, 1
      %p116 = scmp.ne.s32.totalorder %s111, %s113
      %p117 = scmp.eq.s32.totalorder %s14, 0
      %p118 = por %p116, %p117
      %p119 = scmp.ne.s32.totalorder %s111, %s113
      %p120 = scmp.eq.s32.totalorder %s19, 1
      %p121 = por %p119, %p120
      %p122 = scmp.ne.s32.totalorder %s113, %s114
      %p123 = scmp.eq.s32.totalorder %s19, 0
      %p124 = por %p122, %p123
      %p125 = scmp.ne.s32.totalorder %s113, %s114
      %p126 = scmp.eq.s32.totalorder %s20, 1
      %p127 = por %p125, %p126
      %p129 = scmp.ne.s32.totalorder %s114, %s128
      %p130 = scmp.eq.s32.totalorder %s20, 0
      %p131 = por %p129, %p130
      %s132 = ssub.s32 %s14, %s21
      %p133 = scmp.eq.s32.totalorder %s132, 0
      %s135 = sadd.s32 %s134, 1
      %s136 = scalar_select %p133, %s134, %s135
      %p139 = pneg %p133
      %p140 = scmp.eq.s32.totalorder %s14, 1
      %p141 = por %p139, %p140
      %p142 = scmp.ne.s32.totalorder %s134, %s137
      %p143 = scmp.eq.s32.totalorder %s14, 0
      %p144 = por %p142, %p143
      %p145 = scmp.ne.s32.totalorder %s134, %s137
      %p146 = scmp.eq.s32.totalorder %s19, 1
      %p147 = por %p145, %p146
      %p148 = scmp.ne.s32.totalorder %s137, %s138
      %p149 = scmp.eq.s32.totalorder %s19, 0
      %p150 = por %p148, %p149
      %p151 = scmp.ne.s32.totalorder %s137, %s138
      %p152 = scmp.eq.s32.totalorder %s20, 1
      %p153 = por %p151, %p152
      %p155 = scmp.ne.s32.totalorder %s138, %s154
      %p156 = scmp.eq.s32.totalorder %s20, 0
      %p157 = por %p155, %p156
      %p158 = scmp.le.s32.totalorder 1, %s14
      %p159 = scmp.lt.s32.totalorder %s14, 3
      %p160 = pnand %p158, %p159
      %p161 = pneg %p160
      // Predicated region
      $region9: #{mlp_skip.1} parent=5 // pred_check
        _
      $region10: #{mlp_skip.1} parent=5 // pred_check_branch
        %163 = sbr.rel (%p160) target = $region12
      $region11: #{mlp_skip.1} parent=5 // pred_region
        %s164 = ssub.s32 %s14, 1
        // Predicated region
        $region13: #{mlp_skip.1} parent=11 // pred_check
          %p165 = pneg %p61
        $region14: #{mlp_skip.1} parent=11 // pred_check_branch
          %167 = sbr.rel (%p165) target = $region16
        $region15: #{mlp_skip.1} parent=11 // pred_region
          _
        $region16: #{mlp_skip.1} parent=11 // pred_fallthru
          _
        // Predicated region
        $region17: #{mlp_skip.1} parent=11 // pred_check
          %p168 = pneg %p82
        $region18: #{mlp_skip.1} parent=11 // pred_check_branch
          %170 = sbr.rel (%p168) target = $region20
        $region19: #{mlp_skip.1} parent=11 // pred_region
          _
        $region20: #{mlp_skip.1} parent=11 // pred_fallthru
          _
        // Predicated region
        $region21: #{mlp_skip.1} parent=11 // pred_check
          %p171 = pneg %p103
        $region22: #{mlp_skip.1} parent=11 // pred_check_branch
          %173 = sbr.rel (%p171) target = $region24
        $region23: #{mlp_skip.1} parent=11 // pred_region
          _
        $region24: #{mlp_skip.1} parent=11 // pred_fallthru
          _
        // Predicated region
        $region25: #{mlp_skip.1} parent=11 // pred_check
          %p174 = pneg %p124
        $region26: #{mlp_skip.1} parent=11 // pred_check_branch
          %176 = sbr.rel (%p174) target = $region28
        $region27: #{mlp_skip.1} parent=11 // pred_region
          _
        $region28: #{mlp_skip.1} parent=11 // pred_fallthru
          _
      $region12: #{mlp_skip.1} parent=5 // pred_fallthru
        _
      %p177 = scmp.lt.s32.totalorder %s14, 2
      // Predicated region
      $region29: #{mlp_skip.1} parent=5 // pred_check
        %p178 = pneg %p177
      $region30: #{mlp_skip.1} parent=5 // pred_check_branch
        %180 = sbr.rel (%p178) target = $region32
      $region31: #{mlp_skip.1} parent=5 // pred_region
        // Predicated region
        $region33: #{mlp_skip.1} parent=31 // pred_check
          %p181 = pneg %p34
        $region34: #{mlp_skip.1} parent=31 // pred_check_branch
          %183 = sbr.rel (%p181) target = $region36
        $region35: #{mlp_skip.1} parent=31 // pred_region
          %p184 = scmp.lt.s32.totalorder %s14, 1
          %s185 = scalar_select %p184, %s14, 1
          %s186 = smul.addr %s185, 8
          %s187 = scalar_lea.vmem %s0, %s186
        $region36: #{mlp_skip.1} parent=31 // pred_fallthru
          _
      $region32: #{mlp_skip.1} parent=5 // pred_fallthru
        _
      %p188 = scmp.le.s32.totalorder 1, %s14
      %p189 = scmp.lt.s32.totalorder %s14, 3
      %p190 = pnand %p188, %p189
      %p191 = pneg %p190
      // Predicated region
      $region37: #{mlp_skip.1} parent=5 // pred_check
        _
      $region38: #{mlp_skip.1} parent=5 // pred_check_branch
        %193 = sbr.rel (%p190) target = $region40
      $region39: #{mlp_skip.1} parent=5 // pred_region
        %s194 = ssub.s32 %s14, 1
        %p195 = scmp.lt.s32.totalorder %s19, 1
        %s196 = scalar_select %p195, %s19, 1
        %s197 = smul.addr %s196, 8
        %s198 = scalar_lea.vmem %s0, %s197
        %p199 = pneg %p40
        %p200 = pneg %p37
        %p201 = pneg %p61
        %p202 = pneg %p58
        %p203 = pneg %p82
        %p204 = pneg %p79
        %p205 = pneg %p103
        %p206 = pneg %p100
        %p207 = pneg %p124
        %p208 = pneg %p121
        %p209 = pneg %p150
        %p210 = pneg %p147
        %s211 = sand.u32 %s137, 1
        %s212 = scalar_lea.sflag [#allocation3], %s211
        %s213 = sand.u32 %s137, 1
        %s214 = smul.addr %s213, 8
        %s215 = scalar_lea.vmem [#allocation2], %s214
        %p216 = scmp.lt.s32.totalorder %s19, 1
        %s217 = scalar_select %p216, %s19, 1
        %s218 = smul.addr %s217, 8
        %s219 = scalar_lea.vmem %s0, %s218
        %v221 = vld [vmem:[%s219] sm:$0xff]
        %v222 = vpack.c.bf16 %v221, %v221
        %v223 = vld [vmem:[%s1] sm:$0xf]
        %v224 = vld [vmem:[%s1 + $0x4] sm:$0xf]
        %v225 = vld [vmem:[%s1 + $0x8] sm:$0xf]
        %v226 = vld [vmem:[%s1 + $0xc] sm:$0xf]
        %v227 = vld [vmem:[%s2] sm:$0x1]
        %v229 = vperm.slane %v227, 0
        %v235 = vunpack.c.l.b16 %v223
        %v236 = vunpack.c.l.b16 %v224
        %v237 = vunpack.c.l.b16 %v225
        %v238 = vunpack.c.l.b16 %v226
        %v239 = vpack.c.b16 %v236, %v235
        %v240 = vpack.c.b16 %v238, %v237
        %vm243 = vcmask 261120
        %v245 = vsel %vm243, %v222, 0
        %247 = vmatpush.bf16.msra.mxu0 0
        %248 = vmatpush.bf16.msra.mxu0 0
        %249 = vmatpush.bf16.msra.mxu0 0
        %250 = vmatpush.bf16.msra.mxu0 0
        %251 = vmatpush.bf16.msra.mxu0 0
        %252 = vmatpush.bf16.msra.mxu0 0
        %253 = vmatpush.bf16.msra.mxu0 %v240
        %254 = vmatpush.bf16.msra.mxu0 %v239
        %255 = vmatmul.bf16.gmra.mxu0 %v245
        %v256 = vpop.f32.mrf.mxu0
        %v257 = vadd.f32 %v229, %v256
        %v258 = vpop.f32.mrf.mxu0
        %259 = vdwg.mxu0
        %v260 = vmul.f32 %v257, 0.5
        %v261 = vmul.f32 %v257, 0.70710677
        %v262 = vmul.f32 %v261, %v261
        %v263 = vmin.f32 16.0, %v262
        %v264 = vmul.f32 %v263, 2.1237322e-06
        %v265 = vadd.f32 %v264, 0.00028619796
        %v266 = vmul.f32 %v263, %v265
        %v267 = vadd.f32 %v266, 0.0036580483
        %v268 = vmul.f32 %v263, %v267
        %v269 = vadd.f32 %v268, 0.05243302
        %v270 = vmul.f32 %v263, %v269
        %v271 = vadd.f32 %v270, 0.18741608
        %v272 = vmul.f32 %v263, %v271
        %v273 = vadd.f32 %v272, 1.1283791
        %v274 = vmul.f32 %v261, %v273
        %v275 = vmul.f32 %v263, 3.8918573e-05
        %v276 = vadd.f32 %v275, 0.001143296
        %v277 = vmul.f32 %v263, %v276
        %v278 = vadd.f32 %v277, 0.014752088
        %v279 = vmul.f32 %v263, %v278
        %v280 = vadd.f32 %v279, 0.112945676
        %v281 = vmul.f32 %v263, %v280
        %v282 = vadd.f32 %v281, 0.4994258
        %v283 = vmul.f32 %v263, %v282
        %v284 = vadd.f32 %v283, 1.0
        %v285 = vrcp.pop %v284
        %v286 = vmul.f32 %v284, %v285
        %v287 = vsub.f32 1.0, %v286
        %v288 = vmul.f32 %v285, %v287
        %v289 = vadd.f32 %v285, %v288
        %vm290 = vweird.f32 %v284
        %vm291 = vweird.f32 %v285
        %vm292 = vmor %vm290, %vm291
        %v293 = vsel %vm292, %v285, %v289
        %v294 = vand.u32 2147483647, %v284
        %vm295 = vcmp.eq.f32.partialorder %v294, 8.507059e+37
        %v296 = vand.u32 %v284, 2147483648
        %v297 = vor.u32 1.1754944e-38, %v296
        %v298 = vsel %vm295, %v297, %v293
        %v299 = vmul.f32 %v274, %v298
        %v300 = vmin.f32 %v299, 1.0
        %v301 = vmax.f32 %v300, -1.0
        %v302 = vadd.f32 %v301, 1.0
        %v303 = vmul.f32 %v260, %v302
        %v304 = vpack.c.bf16 %v303, %v303
        %v305 = vld [vmem:[%s3] sm:$0xf]
        %v306 = vld [vmem:[%s3 + $0x4] sm:$0xf]
        %v307 = vld [vmem:[%s3 + $0x8] sm:$0xf]
        %v308 = vld [vmem:[%s3 + $0xc] sm:$0xf]
        %v309 = vld [vmem:[%s3 + $0x10] sm:$0xf]
        %v310 = vld [vmem:[%s3 + $0x14] sm:$0xf]
        %v311 = vld [vmem:[%s3 + $0x18] sm:$0xf]
        %v312 = vld [vmem:[%s3 + $0x1c] sm:$0xf]
        %v313 = vld [vmem:[%s3 + $0x20] sm:$0xf]
        %v314 = vld [vmem:[%s3 + $0x24] sm:$0xf]
        %v315 = vld [vmem:[%s3 + $0x28] sm:$0xf]
        %v316 = vld [vmem:[%s3 + $0x2c] sm:$0xf]
        %v317 = vld [vmem:[%s3 + $0x30] sm:$0xf]
        %v318 = vld [vmem:[%s3 + $0x34] sm:$0xf]
        %v319 = vld [vmem:[%s3 + $0x38] sm:$0xf]
        %v320 = vld [vmem:[%s3 + $0x3c] sm:$0xf]
        %v321 = vld [vmem:[%s4] sm:$0x1]
        %v323 = vperm.slane %v321, 0
        %v341 = vunpack.c.l.b16 %v305
        %v342 = vunpack.c.l.b16 %v306
        %v343 = vunpack.c.l.b16 %v307
        %v344 = vunpack.c.l.b16 %v308
        %v345 = vunpack.c.l.b16 %v309
        %v346 = vunpack.c.l.b16 %v310
        %v347 = vunpack.c.l.b16 %v311
        %v348 = vunpack.c.l.b16 %v312
        %v349 = vunpack.c.l.b16 %v313
        %v350 = vunpack.c.l.b16 %v314
        %v351 = vunpack.c.l.b16 %v315
        %v352 = vunpack.c.l.b16 %v316
        %v353 = vunpack.c.l.b16 %v317
        %v354 = vunpack.c.l.b16 %v318
        %v355 = vunpack.c.l.b16 %v319
        %v356 = vunpack.c.l.b16 %v320
        %v357 = vpack.c.b16 %v342, %v341
        %v358 = vpack.c.b16 %v344, %v343
        %v359 = vpack.c.b16 %v346, %v345
        %v360 = vpack.c.b16 %v348, %v347
        %v361 = vpack.c.b16 %v350, %v349
        %v362 = vpack.c.b16 %v352, %v351
        %v363 = vpack.c.b16 %v354, %v353
        %v364 = vpack.c.b16 %v356, %v355
        %373 = vmatpush.bf16.msra.mxu0 %v364
        %374 = vmatpush.bf16.msra.mxu0 %v363
        %375 = vmatpush.bf16.msra.mxu0 %v362
        %376 = vmatpush.bf16.msra.mxu0 %v361
        %377 = vmatpush.bf16.msra.mxu0 %v360
        %378 = vmatpush.bf16.msra.mxu0 %v359
        %379 = vmatpush.bf16.msra.mxu0 %v358
        %380 = vmatpush.bf16.msra.mxu0 %v357
        %381 = vmatmul.bf16.gmra.mxu0 %v304
        %v382 = vpop.f32.mrf.mxu0
        %v383 = vadd.f32 %v323, %v382
        %v384 = vpop.f32.mrf.mxu0
        %385 = vdwg.mxu0
        %v386 = vmul.f32 %v383, 0.5
        %v387 = vmul.f32 %v383, 0.70710677
        %v388 = vmul.f32 %v387, %v387
        %v389 = vmin.f32 16.0, %v388
        %v390 = vmul.f32 %v389, 2.1237322e-06
        %v391 = vadd.f32 %v390, 0.00028619796
        %v392 = vmul.f32 %v389, %v391
        %v393 = vadd.f32 %v392, 0.0036580483
        %v394 = vmul.f32 %v389, %v393
        %v395 = vadd.f32 %v394, 0.05243302
        %v396 = vmul.f32 %v389, %v395
        %v397 = vadd.f32 %v396, 0.18741608
        %v398 = vmul.f32 %v389, %v397
        %v399 = vadd.f32 %v398, 1.1283791
        %v400 = vmul.f32 %v387, %v399
        %v401 = vmul.f32 %v389, 3.8918573e-05
        %v402 = vadd.f32 %v401, 0.001143296
        %v403 = vmul.f32 %v389, %v402
        %v404 = vadd.f32 %v403, 0.014752088
        %v405 = vmul.f32 %v389, %v404
        %v406 = vadd.f32 %v405, 0.112945676
        %v407 = vmul.f32 %v389, %v406
        %v408 = vadd.f32 %v407, 0.4994258
        %v409 = vmul.f32 %v389, %v408
        %v410 = vadd.f32 %v409, 1.0
        %v411 = vrcp.pop %v410
        %v412 = vmul.f32 %v410, %v411
        %v413 = vsub.f32 1.0, %v412
        %v414 = vmul.f32 %v411, %v413
        %v415 = vadd.f32 %v411, %v414
        %vm416 = vweird.f32 %v410
        %vm417 = vweird.f32 %v411
        %vm418 = vmor %vm416, %vm417
        %v419 = vsel %vm418, %v411, %v415
        %v420 = vand.u32 2147483647, %v410
        %vm421 = vcmp.eq.f32.partialorder %v420, 8.507059e+37
        %v422 = vand.u32 %v410, 2147483648
        %v423 = vor.u32 1.1754944e-38, %v422
        %v424 = vsel %vm421, %v423, %v419
        %v425 = vmul.f32 %v400, %v424
        %v426 = vmin.f32 %v425, 1.0
        %v427 = vmax.f32 %v426, -1.0
        %v428 = vadd.f32 %v427, 1.0
        %v429 = vmul.f32 %v386, %v428
        %v430 = vmul.f32 %v221, 0.8
        %v431 = vmul.f32 %v429, 0.2
        %v432 = vadd.f32 %v430, %v431
        %433 = vst.msk [vmem:[%s215] sm:$0xff] %vm243, %v432
        %s434 = sand.u32 %s137, 1
        %s435 = scalar_lea.sflag [#allocation3], %s434
        %s436 = sand.u32 %s137, 1
        %s437 = smul.addr %s436, 8
        %s438 = scalar_lea.vmem [#allocation2], %s437
        // Predicated region
        $region41: #{mlp_skip.1} parent=39 // pred_check
          %p439 = pneg %p147
        $region42: #{mlp_skip.1} parent=39 // pred_check_branch
          %441 = sbr.rel (%p439) target = $region44
        $region43: #{mlp_skip.1} parent=39 // pred_region
          %443 = vsyncadd %s435, 0
          %s444 = smul.addr %s19, 8
          %s445 = scalar_lea.hbm %s5, %s444
          %s447 = sshll.u32 %s438, 4
          %s448 = int_to_ptr.vmem [resolvable:$true] %s447
          %s449 = sshll.u32 %s445, 4
          %s450 = int_to_ptr.hbm [resolvable:$true] %s449
          %452 = dma.vmem_to_hbm [thread:$0]  %s448, 128, %s450, %s435
        $region44: #{mlp_skip.1} parent=39 // pred_fallthru
          _
      $region40: #{mlp_skip.1} parent=5 // pred_fallthru
        _
      %p453 = scmp.le.s32.totalorder 2, %s14
      // Predicated region
      $region45: #{mlp_skip.1} parent=5 // pred_check
        %p454 = pneg %p453
      $region46: #{mlp_skip.1} parent=5 // pred_check_branch
        %456 = sbr.rel (%p454) target = $region48
      $region47: #{mlp_skip.1} parent=5 // pred_region
        %s457 = ssub.s32 %s14, 2
        // Predicated region
        $region49: #{mlp_skip.1} parent=47 // pred_check
          %p458 = pneg %p153
        $region50: #{mlp_skip.1} parent=47 // pred_check_branch
          %460 = sbr.rel (%p458) target = $region52
        $region51: #{mlp_skip.1} parent=47 // pred_region
          %s461 = sand.u32 %s138, 1
          %s462 = scalar_lea.sflag [#allocation3], %s461
          %s463 = sand.u32 %s138, 1
          %s464 = smul.addr %s463, 8
          %s465 = scalar_lea.vmem [#allocation2], %s464
          %467 = dma.done %s462, 128
        $region52: #{mlp_skip.1} parent=47 // pred_fallthru
          _
      $region48: #{mlp_skip.1} parent=5 // pred_fallthru
        _
    $region6: #{mlp_skip.1} parent=1 // loop_footer
      %s18 = sadd.s32 1, %s14
    $region7: #{mlp_skip.1} parent=1 // loop_footer_branch
      %13 = sbr.rel target = $region3
    $region8: #{mlp_skip.1} parent=1 // loop_exit
      _
    %468 = vsyncpa [#allocation3], 1
    %s469 = scalar_lea.sflag [#allocation3], 1
    %470 = vsyncpa %s469, 1

</llo_original>
